<compile_context>
chip_gen: v5e
topology: v5e:2x2
jax: 0.10.0
libtpu: 0.0.40
codegen_flags: <defaults>
</compile_context>

<pallas_src>
import math

import jax
import jax.numpy as jnp
import numpy as np
from jax.experimental import pallas as pl
from jax.experimental.pallas import tpu as pltpu

_LANES = 128


def _round_up(x, m):
    return ((x + m - 1) // m) * m


def _dequant_linear_kernel(scale_ref, xq_ref, w_ref, bcorr_ref, o_ref):
    """Computes one (tm, out_lanes) packed-output tile of the fused dequant + Linear."""
    # int8 -> bf16 is lossless; MXU runs its fast bf16 path with f32 accumulation.
    acc = jnp.dot(
        xq_ref[...].astype(jnp.bfloat16),
        w_ref[...],
        preferred_element_type=jnp.float32,
    )
    # f32 epilogue: per-tensor scale + precomputed (b - scale*zp*colsum(W^T)) row.
    o_ref[...] = acc * scale_ref[0] + bcorr_ref[...]


def pack_dequant_linear_params(weight, bias, scale, zero_point):
    """One-time prep of the wrapped nn.Linear + dequant affine. Cache and reuse.

    Returns:
      w_packed: bf16 [pack*H, pack*O]  block-diagonal (pack copies of W^T)
      bcorr:    f32  [1, pack*O]       b - scale*zp*colsum(W^T_bf16), tiled pack times
      scale:    f32  [1]               per-tensor activation scale
    """
    O, H = weight.shape
    # TODO(synk): generalize to H / O not dividing 128 (fall back to lane zero-padding).
    assert _LANES % H == 0 and _LANES % O == 0, "packing path needs H, O to divide 128"
    pack = _LANES // H

    scale_f = jnp.asarray(scale).reshape(()).astype(jnp.float32)
    zp_f = jnp.asarray(zero_point).reshape(()).astype(jnp.float32)  # PyTorch keeps zp int

    # W^T in the same bf16 rounding the MXU consumes.
    w_t_bf16 = jnp.transpose(weight).astype(jnp.bfloat16)                  # [H, O]
    # Block-diagonal 128-lane weight: kron(I_pack, W^T).
    w_packed = jnp.kron(
        jnp.eye(pack, dtype=jnp.float32), w_t_bf16.astype(jnp.float32)
    ).astype(jnp.bfloat16)                                                  # [pack*H, pack*O]

    # Hoisted-dequant correction row (uses the same bf16-rounded W^T), tiled to 128 lanes.
    colsum = jnp.sum(w_t_bf16.astype(jnp.float32), axis=0)                  # [O]
    bcorr = bias.astype(jnp.float32) - scale_f * zp_f * colsum              # [O]
    bcorr = jnp.tile(bcorr, (pack,)).reshape(1, pack * O)                   # [1, pack*O]

    return w_packed, bcorr, scale_f.reshape(1)


def dequant_wrapper_forward(x_q, w_packed, bcorr, scale_arr, *, tile_m=4096):
    """Pallas forward of DequantWrapper(nn.Linear): fp32 = dequant(int8 X) @ W^T + b.

    Args:
      x_q:      int8 [..., H] quantized activations
      w_packed, bcorr, scale_arr: outputs of pack_dequant_linear_params (cached)
    Returns:
      f32 [..., O]
    """
    lead = x_q.shape[:-1]
    H = x_q.shape[-1]
    in_lanes, out_lanes = w_packed.shape
    pack = in_lanes // H
    O = out_lanes // pack
    M = int(math.prod(lead)) if lead else 1

    # ---- pack `pack` consecutive rows into one lane-dense row (contiguous reshape) ----
    m_tail = (-M) % pack
    xq_flat = x_q.reshape(M, H)
    if m_tail:  # sub-4-row pad only when M % pack != 0; demo shapes skip it entirely
        xq_flat = jnp.pad(xq_flat, ((0, m_tail), (0, 0)))
    m_pack = (M + m_tail) // pack
    xq_packed = xq_flat.reshape(m_pack, in_lanes)

    # ---- row tiling: large tiles amortize grid-step overhead; keep >= ~8 steps so the
    #      "parallel" axis feeds both v7x TensorCores for moderate M ----
    if m_pack <= 1024:
        tm = m_pack                       # single resident tile (block == full array dims)
    else:
        tm = min(tile_m, max(512, _round_up(pl.cdiv(m_pack, 8), 32)))
    grid = (pl.cdiv(m_pack, tm),)         # ragged tail: OOB reads unused, OOB writes dropped

    out = pl.pallas_call(
        _dequant_linear_kernel,
        out_shape=jax.ShapeDtypeStruct((m_pack, out_lanes), jnp.float32),
        grid=grid,
        in_specs=[
            pl.BlockSpec(memory_space=pltpu.MemorySpace.SMEM),        # scale (scalar)
            pl.BlockSpec((tm, in_lanes), lambda i: (i, 0)),           # packed int8 rows
            pl.BlockSpec((in_lanes, out_lanes), lambda i: (0, 0)),    # block-diag W (resident)
            pl.BlockSpec((1, out_lanes), lambda i: (0, 0)),           # bias-correction row
        ],
        out_specs=pl.BlockSpec((tm, out_lanes), lambda i: (i, 0)),
        compiler_params=pltpu.CompilerParams(
            dimension_semantics=("parallel",),   # shard row tiles across TCs on v7x
        ),
        cost_estimate=pl.CostEstimate(
            flops=2 * m_pack * in_lanes * out_lanes,
            transcendentals=0,
            bytes_accessed=(
                m_pack * in_lanes                 # int8 activations in
                + 2 * in_lanes * out_lanes        # bf16 block-diag weights
                + 4 * out_lanes + 4               # bias-correction row + scale
                + 4 * m_pack * out_lanes          # f32 output writeback (dominant)
            ),
        ),
    )(scale_arr, xq_packed, w_packed, bcorr)

    out = out.reshape(M + m_tail, O)
    if m_tail:
        out = out[:M]
    return out.reshape(*lead, O)


if __name__ == "__main__":
    key = jax.random.PRNGKey(0)
    k_x, k_w, k_b = jax.random.split(key, 3)

    B, S, H, O = 2, 8, 32, 32

    # Deterministic "module" parameters (nn.Linear(H, O) shapes).
    bound = 1.0 / math.sqrt(H)
    weight = jax.random.uniform(k_w, (O, H), jnp.float32, -bound, bound)
    bias = jax.random.uniform(k_b, (O,), jnp.float32, -bound, bound)

    # Synthetic per-tensor quantized int8 input (what the fallback layer receives).
    x_fp = jax.random.normal(k_x, (B, S, H), jnp.float32)
    scale = jnp.array([0.05], dtype=jnp.float32)
    zero_point = jnp.array([3], dtype=jnp.int32)   # PyTorch keeps zero_point as int
    x_q = jnp.clip(
        jnp.round(x_fp / scale[0]) + zero_point[0], -128, 127
    ).astype(jnp.int8)

    # One-time weight prep (cached across calls); per-call path is one pallas_call.
    w_packed, bcorr, scale_arr = pack_dequant_linear_params(weight, bias, scale, zero_point)
    forward = jax.jit(dequant_wrapper_forward)

    y = forward(x_q, w_packed, bcorr, scale_arr)
    y = jax.block_until_ready(y)
    assert y.shape == (B, S, O) and y.dtype == jnp.float32

    # ---- host-side float64 references (avoids TPU matmul-precision ambiguity) ----
    xq64 = np.asarray(x_q, np.float64).reshape(B * S, H)
    w64 = np.asarray(weight, np.float64)
    b64 = np.asarray(bias, np.float64)
    s64 = float(scale[0])
    zp64 = float(zero_point[0])
    x_deq = (xq64 - zp64) * s64

    # (a) exact fp32-module semantics.
    y_fp = (x_deq @ w64.T + b64).reshape(B, S, O)
    # (b) same bf16-rounded weights the kernel feeds the MXU -> tight consistency check.
    w_bf64 = np.asarray(weight.astype(jnp.bfloat16).astype(jnp.float32), np.float64)
    y_bf = (x_deq @ w_bf64.T + b64).reshape(B, S, O)

    y_np = np.asarray(y, np.float64)
    # Tight: kernel vs. same-precision (bf16-weight) reference.
    assert np.allclose(y_np, y_bf, atol=2e-4, rtol=2e-4), float(np.max(np.abs(y_np - y_bf)))
    # Sanity: kernel vs. full-fp32 module semantics (slack only for bf16 weight rounding).
    assert np.allclose(y_np, y_fp, atol=5e-2, rtol=5e-2), float(np.max(np.abs(y_np - y_fp)))

    print("KERNEL_OK")
</pallas_src>

<mosaic_0001>
module attributes {stable_mosaic.version = 11 : i64} {
  func.func @_dequant_linear_kernel(%arg0: i32, %arg1: memref<1xf32, #tpu.memory_space<smem>>, %arg2: memref<4x128xi8, #tpu.memory_space<vmem>>, %arg3: memref<128x128xbf16, #tpu.memory_space<vmem>>, %arg4: memref<1x128xf32, #tpu.memory_space<vmem>>, %arg5: memref<4x128xf32, #tpu.memory_space<vmem>>) attributes {dimension_semantics = [#tpu.dimension_semantics<parallel>], iteration_bounds = array<i64: 1>, scalar_prefetch = 0 : i64, scratch_operands = 0 : i64, tpu.core_type = #tpu.core_type<tc>, window_params = [{transform_indices = @transform_0, window_bounds = array<i64: 1>}, {transform_indices = @transform_1, window_bounds = array<i64: 4, 128>}, {pipeline_mode = #tpu.pipeline_mode<synchronous>, transform_indices = @transform_2, window_bounds = array<i64: 128, 128>}, {pipeline_mode = #tpu.pipeline_mode<synchronous>, transform_indices = @transform_3, window_bounds = array<i64: 1, 128>}, {transform_indices = @transform_4, window_bounds = array<i64: 4, 128>}]} {
    %c0 = arith.constant 0 : index
    %c0_0 = arith.constant 0 : index
    %0 = vector.load %arg2[%c0, %c0_0] : memref<4x128xi8, #tpu.memory_space<vmem>>, vector<4x128xi8>
    %1 = arith.sitofp %0 : vector<4x128xi8> to vector<4x128xbf16>
    %c0_1 = arith.constant 0 : index
    %c0_2 = arith.constant 0 : index
    %2 = vector.load %arg3[%c0_1, %c0_2] : memref<128x128xbf16, #tpu.memory_space<vmem>>, vector<128x128xbf16>
    %cst = arith.constant dense<0.000000e+00> : vector<4x128xf32>
    %3 = tpu.matmul %1, %2, %cst {dimension_numbers = #tpu.dot_dimension_numbers<[1], [0], [0], [1], [0, 0, 1, 1], [], []>} : vector<4x128xbf16>, vector<128x128xbf16>, vector<4x128xf32> -> vector<4x128xf32>
    %c0_3 = arith.constant 0 : index
    %4 = memref.load %arg1[%c0_3] : memref<1xf32, #tpu.memory_space<smem>>
    %5 = vector.broadcast %4 : f32 to vector<4x128xf32>
    %6 = arith.mulf %3, %5 : vector<4x128xf32>
    %c0_4 = arith.constant 0 : index
    %c0_5 = arith.constant 0 : index
    %7 = vector.load %arg4[%c0_4, %c0_5] : memref<1x128xf32, #tpu.memory_space<vmem>>, vector<1x128xf32>
    %8 = vector.broadcast %7 : vector<1x128xf32> to vector<4x128xf32>
    %9 = arith.addf %6, %8 : vector<4x128xf32>
    %c0_6 = arith.constant 0 : index
    %c0_7 = arith.constant 0 : index
    %10 = vector.load %arg5[%c0_6, %c0_7] : memref<4x128xf32, #tpu.memory_space<vmem>>, vector<4x128xf32>
    tpu.vector_store %arg5[%c0_6, %c0_7], %9 {strides = array<i32>} : memref<4x128xf32, #tpu.memory_space<vmem>>, vector<4x128xf32>,
    return
  }
  func.func @transform_0(%arg0: i32) -> i32 {
    %c0_i32 = arith.constant 0 : i32
    %c0_i32_0 = arith.constant 0 : i32
    return %c0_i32 : i32
  }
  func.func @transform_1(%arg0: i32) -> (i32, i32) {
    %c0_i32 = arith.constant 0 : i32
    %c0_i32_0 = arith.constant 0 : i32
    return %arg0, %c0_i32 : i32, i32
  }
  func.func @transform_2(%arg0: i32) -> (i32, i32) {
    %c0_i32 = arith.constant 0 : i32
    %c0_i32_0 = arith.constant 0 : i32
    %c0_i32_1 = arith.constant 0 : i32
    return %c0_i32, %c0_i32_0 : i32, i32
  }
  func.func @transform_3(%arg0: i32) -> (i32, i32) {
    %c0_i32 = arith.constant 0 : i32
    %c0_i32_0 = arith.constant 0 : i32
    %c0_i32_1 = arith.constant 0 : i32
    return %c0_i32, %c0_i32_0 : i32, i32
  }
  func.func @transform_4(%arg0: i32) -> (i32, i32) {
    %c0_i32 = arith.constant 0 : i32
    %c0_i32_0 = arith.constant 0 : i32
    return %arg0, %c0_i32 : i32, i32
  }
}

</mosaic_0001>

<llo_original>
// kernel: dequant_wrapper_forward.1
$region0: #{dequant_wrapper_forward.1}
  #allocation0 [shape = 'u32[]', space=smem, size = 0x4, offset = 0x4, fixed_abs, tag = 'smem constant byte address 0x4 - core index']
  #allocation1 [shape = 'u32[72,128]{1,0:T(1,128)}', space=vmem, size = 0x9000, scoped, tag = 'internal scratch']
  #allocation2 [shape = 'f32[1]{0:T(128)S(6)}', space=smem, size = 0x200, scoped, tag = 'scoped memory for dequant_wrapper_forward.1']
  %s0 = inlined_call_operand.<no memory space> [shape: f32[1], index: 0, kind: input, shape index: {}]
  %s1 = inlined_call_operand.vmem [shape: s8[4,128], index: 1, kind: input, shape index: {}]
  %s2 = inlined_call_operand.hbm [shape: bf16[128,128], index: 2, kind: input, shape index: {}]
  %s3 = inlined_call_operand.vmem [shape: f32[1,128], index: 3, kind: input, shape index: {}]
  %s4 = inlined_call_operand.vmem [shape: f32[4,128], index: 4, kind: output, shape index: {}]
  %s5 = sld [smem:[#allocation0]]
  $region30: #{dequant_wrapper_forward.1} parent=0
    _
  %s7 = ssub.s32 1, %s5
  %s8 = scalar_select 0, %s7, %s5
  %9 = sst [smem:[#allocation2]] %s0
  $region1: #{dequant_wrapper_forward.1} parent=0
    #allocation3 [shape = 'u8[32768]{0}', space=vmem, size = 0x8000, scoped, tag = 'input window, operand 2, single buffered']
    #allocation4 [shape = 's32[1]{0}', space=sflag, size = 0x4, scoped, tag = 'scoped memory for dequant_wrapper_forward.1']
    %10 = vsyncpa [#allocation4], 0
    // Predicated region
    $region2: #{dequant_wrapper_forward.1} parent=1 // pred_check
      _
    $region3: #{dequant_wrapper_forward.1} parent=1 // pred_check_branch
      %12 = sbr.rel (0) target = $region5
    $region4: #{dequant_wrapper_forward.1} parent=1 // pred_region
      _
    $region5: #{dequant_wrapper_forward.1} parent=1 // pred_fallthru
      _
    // Predicated region
    $region6: #{dequant_wrapper_forward.1} parent=1 // pred_check
      _
    $region7: #{dequant_wrapper_forward.1} parent=1 // pred_check_branch
      %14 = sbr.rel (0) target = $region9
    $region8: #{dequant_wrapper_forward.1} parent=1 // pred_region
      _
    $region9: #{dequant_wrapper_forward.1} parent=1 // pred_fallthru
      _
    // Predicated region
    $region10: #{dequant_wrapper_forward.1} parent=1 // pred_check
      _
    $region11: #{dequant_wrapper_forward.1} parent=1 // pred_check_branch
      %16 = sbr.rel (0) target = $region13
    $region12: #{dequant_wrapper_forward.1} parent=1 // pred_region
      %18 = vsyncadd [#allocation4], 0
      %s19 = sshll.u32 %s2, 4
      %s20 = int_to_ptr.hbm [resolvable:$true] %s19
      %s21 = sshll.u32 [#allocation3], 4
      %s22 = int_to_ptr.vmem [resolvable:$true] %s21
      %27 = dma.hbm_to_vmem [thread:$0]  %s20, 1024, %s22, [#allocation4], 64, 64, 4
    $region13: #{dequant_wrapper_forward.1} parent=1 // pred_fallthru
      _
    // Predicated region
    $region14: #{dequant_wrapper_forward.1} parent=1 // pred_check
      _
    $region15: #{dequant_wrapper_forward.1} parent=1 // pred_check_branch
      %29 = sbr.rel (0) target = $region17
    $region16: #{dequant_wrapper_forward.1} parent=1 // pred_region
      _
    $region17: #{dequant_wrapper_forward.1} parent=1 // pred_fallthru
      _
    // Predicated region
    $region18: #{dequant_wrapper_forward.1} parent=1 // pred_check
      _
    $region19: #{dequant_wrapper_forward.1} parent=1 // pred_check_branch
      %31 = sbr.rel (0) target = $region21
    $region20: #{dequant_wrapper_forward.1} parent=1 // pred_region
      %33 = dma.done [#allocation4], 1024
    $region21: #{dequant_wrapper_forward.1} parent=1 // pred_fallthru
      _
    %v34 = vld [vmem:[%s1] sm:$0x1]
    %v35 = vunpack.c.0.s8 %v34
    %v36 = vcvt.s32.f32 %v35
    %v37 = vpack.c.bf16 %v36, %v36
    %v38 = vld [vmem:[#allocation3] sm:$0xf]
    %v39 = vld [vmem:[#allocation3 + $0x4] sm:$0xf]
    %v40 = vld [vmem:[#allocation3 + $0x8] sm:$0xf]
    %v41 = vld [vmem:[#allocation3 + $0xc] sm:$0xf]
    %v42 = vld [vmem:[#allocation3 + $0x10] sm:$0xf]
    %v43 = vld [vmem:[#allocation3 + $0x14] sm:$0xf]
    %v44 = vld [vmem:[#allocation3 + $0x18] sm:$0xf]
    %v45 = vld [vmem:[#allocation3 + $0x1c] sm:$0xf]
    %v46 = vld [vmem:[#allocation3 + $0x20] sm:$0xf]
    %v47 = vld [vmem:[#allocation3 + $0x24] sm:$0xf]
    %v48 = vld [vmem:[#allocation3 + $0x28] sm:$0xf]
    %v49 = vld [vmem:[#allocation3 + $0x2c] sm:$0xf]
    %v50 = vld [vmem:[#allocation3 + $0x30] sm:$0xf]
    %v51 = vld [vmem:[#allocation3 + $0x34] sm:$0xf]
    %v52 = vld [vmem:[#allocation3 + $0x38] sm:$0xf]
    %v53 = vld [vmem:[#allocation3 + $0x3c] sm:$0xf]
    %v70 = vunpack.c.l.b16 %v38
    %v71 = vunpack.c.l.b16 %v39
    %v72 = vunpack.c.l.b16 %v40
    %v73 = vunpack.c.l.b16 %v41
    %v74 = vunpack.c.l.b16 %v42
    %v75 = vunpack.c.l.b16 %v43
    %v76 = vunpack.c.l.b16 %v44
    %v77 = vunpack.c.l.b16 %v45
    %v78 = vunpack.c.l.b16 %v46
    %v79 = vunpack.c.l.b16 %v47
    %v80 = vunpack.c.l.b16 %v48
    %v81 = vunpack.c.l.b16 %v49
    %v82 = vunpack.c.l.b16 %v50
    %v83 = vunpack.c.l.b16 %v51
    %v84 = vunpack.c.l.b16 %v52
    %v85 = vunpack.c.l.b16 %v53
    %v86 = vpack.c.b16 %v71, %v70
    %v87 = vpack.c.b16 %v73, %v72
    %v88 = vpack.c.b16 %v75, %v74
    %v89 = vpack.c.b16 %v77, %v76
    %v90 = vpack.c.b16 %v79, %v78
    %v91 = vpack.c.b16 %v81, %v80
    %v92 = vpack.c.b16 %v83, %v82
    %v93 = vpack.c.b16 %v85, %v84
    %102 = vmatpush.bf16.msra.mxu0 %v93
    %103 = vmatpush.bf16.msra.mxu0 %v92
    %104 = vmatpush.bf16.msra.mxu0 %v91
    %105 = vmatpush.bf16.msra.mxu0 %v90
    %106 = vmatpush.bf16.msra.mxu0 %v89
    %107 = vmatpush.bf16.msra.mxu0 %v88
    %108 = vmatpush.bf16.msra.mxu0 %v87
    %109 = vmatpush.bf16.msra.mxu0 %v86
    %110 = vmatmul.bf16.gmra.mxu0 %v37
    %v111 = vpop.f32.mrf.mxu0
    %v112 = vadd.f32 0.0, %v111
    %v113 = vpop.f32.mrf.mxu0
    %114 = vdwg.mxu0
    %s115 = sld [smem:[#allocation2]]
    %v116 = vstv %s115
    %v117 = vmul.f32 %v112, %v116
    %v118 = vld [vmem:[%s3] sm:$0x1]
    %v120 = vperm.slane %v118, 0
    %v122 = vadd.f32 %v117, %v120
    %123 = vst [vmem:[%s4] sm:$0xf] %v122
    // Predicated region
    $region22: #{dequant_wrapper_forward.1} parent=1 // pred_check
      _
    $region23: #{dequant_wrapper_forward.1} parent=1 // pred_check_branch
      %125 = sbr.rel (0) target = $region25
    $region24: #{dequant_wrapper_forward.1} parent=1 // pred_region
      _
    $region25: #{dequant_wrapper_forward.1} parent=1 // pred_fallthru
      _
    // Predicated region
    $region26: #{dequant_wrapper_forward.1} parent=1 // pred_check
      _
    $region27: #{dequant_wrapper_forward.1} parent=1 // pred_check_branch
      %127 = sbr.rel (0) target = $region29
    $region28: #{dequant_wrapper_forward.1} parent=1 // pred_region
      _
    $region29: #{dequant_wrapper_forward.1} parent=1 // pred_fallthru
      _
    %128 = vsyncpa [#allocation4], 1

</llo_original>
